<compile_context>
chip_gen: v5e
topology: v5e:2x2
jax: 0.10.0
libtpu: 0.0.40
codegen_flags: <defaults>
</compile_context>

<pallas_src>
import functools

import jax
import jax.numpy as jnp
from jax.experimental import pallas as pl
from jax.experimental.pallas import tpu as pltpu

ALPHA = 0.25
GAMMA = 2.0  # kernel specializes gamma == 2 to an explicit square


def _round_up(x, m):
    return (x + m - 1) // m * m


def _bce_focal_kernel(preds_ref, targets_ref, out_ref, *,
                      n_rows, tile_m, blocks_per_core):
    p = pl.program_id(0)   # parallel (megacore) axis
    j = pl.program_id(1)   # reduction axis ("arbitrary")

    @pl.when(j == 0)
    def _():
        out_ref[...] = jnp.zeros_like(out_ref)

    x = preds_ref[...].astype(jnp.float32)
    t = targets_ref[...].astype(jnp.float32)

    # One exponential, reused for both the stable BCE and the stable sigmoid.
    e = jnp.exp(-jnp.abs(x))                               # EUP
    bce = jnp.maximum(x, 0.0) - x * t + jnp.log1p(e)       # BCEWithLogits, stable
    inv = 1.0 / (1.0 + e)
    prob = jnp.where(x >= 0.0, inv, e * inv)               # sigmoid(x), stable
    one_m_p = 1.0 - prob

    # gamma == 2 -> explicit squares (avoids pow lowering through exp/log).
    loss = bce * (t * (ALPHA * (one_m_p * one_m_p)) + (1.0 - t) * (prob * prob))

    # Mask rows past the true batch (ragged tail of the cdiv grid).
    row0 = (p * blocks_per_core + j) * tile_m
    rows = row0 + jax.lax.broadcasted_iota(jnp.int32, loss.shape, 0)
    loss = jnp.where(rows < n_rows, loss, 0.0)

    # VALU-only partial reduction: fold (tile_m, N) into an (8, N) vreg-shaped
    # partial sum (leading reshape axis spans whole vregs -> plain vector adds,
    # no per-step XLU tree reduce to a scalar).
    partial = jnp.sum(loss.reshape(tile_m // 8, 8, loss.shape[-1]), axis=0)
    out_ref[...] += partial[None]


def bce_focal_loss(preds, targets, *, tile_m=2048, num_cores=2):
    assert preds.shape == targets.shape
    M, N = preds.shape
    n_total = M * N

    itemsize = preds.dtype.itemsize + targets.dtype.itemsize
    # Sublane multiple: 16 for packed (bf16/fp16) inputs, 8 for f32.
    sub = 16 if min(preds.dtype.itemsize, targets.dtype.itemsize) < 4 else 8

    # Cap the tile so 2 inputs x 2 pipeline buffers stay under ~36 MiB
    # (safe for v7x's 64 MiB VMEM and for a raised scoped limit on v5e/v6e).
    max_tile_m = max(sub, ((36 << 20) // (2 * N * itemsize)) // sub * sub)
    tile_m = max(sub, min(tile_m, _round_up(M, sub), max_tile_m))
    tile_m = _round_up(tile_m, sub)

    blocks = pl.cdiv(M, tile_m)
    # Shard the block loop across TensorCores (v7x) when it splits evenly.
    n_par = num_cores if (num_cores > 1 and blocks % num_cores == 0) else 1
    blocks_per_core = blocks // n_par

    # VMEM budget: double-buffered inputs + resident accumulators + margin.
    needed = 2 * tile_m * N * itemsize + n_par * 8 * N * 4 + (4 << 20)
    vmem_limit = int(min(48 << 20, max(32 << 20, needed)))

    kernel = functools.partial(
        _bce_focal_kernel, n_rows=M, tile_m=tile_m,
        blocks_per_core=blocks_per_core)

    in_map = lambda p, j: (p * blocks_per_core + j, 0)

    # NOTE: default double-buffering is enough here; pipeline_mode=pl.Buffered(3)
    # is a marginal follow-up once tiles are large.
    partials = pl.pallas_call(
        kernel,
        out_shape=jax.ShapeDtypeStruct((n_par, 8, N), jnp.float32),
        grid_spec=pltpu.PrefetchScalarGridSpec(
            num_scalar_prefetch=0,
            grid=(n_par, blocks_per_core),
            in_specs=[
                pl.BlockSpec((tile_m, N), in_map),
                pl.BlockSpec((tile_m, N), in_map),
            ],
            out_specs=pl.BlockSpec((1, 8, N), lambda p, j: (p, 0, 0)),
        ),
        compiler_params=pltpu.CompilerParams(
            dimension_semantics=("parallel", "arbitrary"),
            vmem_limit_bytes=vmem_limit),
    )(preds, targets)

    # Final cross-lane reduce + mean: once, outside the grid loop.
    return jnp.sum(partials) / jnp.float32(n_total)


def bce_focal_loss_ref(preds, targets, alpha=ALPHA, gamma=GAMMA):
    x = preds.astype(jnp.float32)
    t = targets.astype(jnp.float32)
    bce = jnp.maximum(x, 0.0) - x * t + jnp.log1p(jnp.exp(-jnp.abs(x)))
    p = jax.nn.sigmoid(x)
    return jnp.mean(t * alpha * (1.0 - p) ** gamma * bce
                    + (1.0 - t) * p ** gamma * bce)


if __name__ == "__main__":
    key = jax.random.PRNGKey(0)
    k1, k2, k3, k4 = jax.random.split(key, 4)

    # Small shapes consistent with the module: (batch, num_classes) logits + labels.
    B, C = 16, 128
    preds = jax.random.normal(k1, (B, C), dtype=jnp.float32) * 2.0
    targets = (jax.random.uniform(k2, (B, C)) > 0.9).astype(jnp.float32)

    out = jax.block_until_ready(bce_focal_loss(preds, targets))
    ref = bce_focal_loss_ref(preds, targets)
    assert jnp.allclose(out, ref, rtol=1e-5, atol=1e-6), (out, ref)

    # Ragged batch + bf16 inputs + multi-block grid: exercises tail masking,
    # the parallel block split, and the halved-HBM-traffic path.
    B2, C2 = 200, 128
    preds2 = (jax.random.normal(k3, (B2, C2), dtype=jnp.float32) * 2.0).astype(jnp.bfloat16)
    targets2 = (jax.random.uniform(k4, (B2, C2)) > 0.9).astype(jnp.bfloat16)

    out2 = jax.block_until_ready(bce_focal_loss(preds2, targets2, tile_m=64))
    ref2 = bce_focal_loss_ref(preds2, targets2)
    assert jnp.allclose(out2, ref2, rtol=1e-5, atol=1e-6), (out2, ref2)

    print("KERNEL_OK")
</pallas_src>

<mosaic_0001>
module attributes {stable_mosaic.version = 11 : i64} {
  func.func @_bce_focal_kernel(%arg0: i32, %arg1: i32, %arg2: memref<16x128xf32, #tpu.memory_space<vmem>>, %arg3: memref<16x128xf32, #tpu.memory_space<vmem>>, %arg4: memref<1x8x128xf32, #tpu.memory_space<vmem>>) attributes {dimension_semantics = [#tpu.dimension_semantics<parallel>, #tpu.dimension_semantics<arbitrary>], iteration_bounds = array<i64: 1, 1>, scalar_prefetch = 0 : i64, scratch_operands = 0 : i64, tpu.core_type = #tpu.core_type<tc>, window_params = [{transform_indices = @transform_0, window_bounds = array<i64: 16, 128>}, {transform_indices = @transform_1, window_bounds = array<i64: 16, 128>}, {transform_indices = @transform_2, window_bounds = array<i64: 1, 8, 128>}]} {
    %c0_i32 = arith.constant 0 : i32
    %0 = arith.cmpi eq, %arg1, %c0_i32 : i32
    %1 = arith.extui %0 : i1 to i32
    %c0_i32_0 = arith.constant 0 : i32
    %2 = arith.cmpi ne, %1, %c0_i32_0 : i32
    scf.if %2 {
      %cst_20 = arith.constant 0.000000e+00 : f32
      %51 = vector.broadcast %cst_20 : f32 to vector<1x8x128xf32>
      %c0_21 = arith.constant 0 : index
      %c0_22 = arith.constant 0 : index
      %c0_23 = arith.constant 0 : index
      %52 = vector.load %arg4[%c0_21, %c0_22, %c0_23] : memref<1x8x128xf32, #tpu.memory_space<vmem>>, vector<1x8x128xf32>
      tpu.vector_store %arg4[%c0_21, %c0_22, %c0_23], %51 {strides = array<i32>} : memref<1x8x128xf32, #tpu.memory_space<vmem>>, vector<1x8x128xf32>,
    } else {
    }
    %c0 = arith.constant 0 : index
    %c0_1 = arith.constant 0 : index
    %3 = vector.load %arg2[%c0, %c0_1] : memref<16x128xf32, #tpu.memory_space<vmem>>, vector<16x128xf32>
    %c0_2 = arith.constant 0 : index
    %c0_3 = arith.constant 0 : index
    %4 = vector.load %arg3[%c0_2, %c0_3] : memref<16x128xf32, #tpu.memory_space<vmem>>, vector<16x128xf32>
    %5 = math.absf %3 : vector<16x128xf32>
    %cst = arith.constant 0.000000e+00 : f32
    %6 = vector.broadcast %cst : f32 to vector<16x128xf32>
    %7 = arith.subf %6, %5 : vector<16x128xf32>
    %8 = math.exp %7 : vector<16x128xf32>
    %cst_4 = arith.constant 0.000000e+00 : f32
    %9 = vector.broadcast %cst_4 : f32 to vector<16x128xf32>
    %10 = arith.maximumf %3, %9 : vector<16x128xf32>
    %11 = arith.mulf %3, %4 : vector<16x128xf32>
    %12 = arith.subf %10, %11 : vector<16x128xf32>
    %13 = math.log1p %8 : vector<16x128xf32>
    %14 = arith.addf %12, %13 : vector<16x128xf32>
    %cst_5 = arith.constant 1.000000e+00 : f32
    %15 = vector.broadcast %cst_5 : f32 to vector<16x128xf32>
    %16 = arith.addf %15, %8 : vector<16x128xf32>
    %cst_6 = arith.constant 1.000000e+00 : f32
    %17 = vector.broadcast %cst_6 : f32 to vector<16x128xf32>
    %18 = arith.divf %17, %16 : vector<16x128xf32>
    %cst_7 = arith.constant 0.000000e+00 : f32
    %19 = vector.broadcast %cst_7 : f32 to vector<16x128xf32>
    %20 = arith.cmpf oge, %3, %19 : vector<16x128xf32>
    %21 = arith.mulf %8, %18 : vector<16x128xf32>
    %22 = arith.select %20, %18, %21 : vector<16x128xi1>, vector<16x128xf32>
    %cst_8 = arith.constant 1.000000e+00 : f32
    %23 = vector.broadcast %cst_8 : f32 to vector<16x128xf32>
    %24 = arith.subf %23, %22 : vector<16x128xf32>
    %25 = arith.mulf %24, %24 : vector<16x128xf32>
    %cst_9 = arith.constant 2.500000e-01 : f32
    %26 = vector.broadcast %cst_9 : f32 to vector<16x128xf32>
    %27 = arith.mulf %26, %25 : vector<16x128xf32>
    %28 = arith.mulf %4, %27 : vector<16x128xf32>
    %cst_10 = arith.constant 1.000000e+00 : f32
    %29 = vector.broadcast %cst_10 : f32 to vector<16x128xf32>
    %30 = arith.subf %29, %4 : vector<16x128xf32>
    %31 = arith.mulf %22, %22 : vector<16x128xf32>
    %32 = arith.mulf %30, %31 : vector<16x128xf32>
    %33 = arith.addf %28, %32 : vector<16x128xf32>
    %34 = arith.mulf %14, %33 : vector<16x128xf32>
    %c1_i32 = arith.constant 1 : i32
    %35 = arith.muli %arg0, %c1_i32 : i32
    %36 = arith.addi %35, %arg1 : i32
    %c16_i32 = arith.constant 16 : i32
    %37 = arith.muli %36, %c16_i32 : i32
    %38 = tpu.iota {dimensions = array<i32: 0>} : vector<16x128xi32>
    %39 = vector.broadcast %37 : i32 to vector<16x128xi32>
    %40 = arith.addi %39, %38 : vector<16x128xi32>
    %c16_i32_11 = arith.constant 16 : i32
    %41 = vector.broadcast %c16_i32_11 : i32 to vector<16x128xi32>
    %42 = arith.cmpi slt, %40, %41 : vector<16x128xi32>
    %cst_12 = arith.constant 0.000000e+00 : f32
    %43 = vector.broadcast %cst_12 : f32 to vector<16x128xf32>
    %44 = arith.select %42, %34, %43 : vector<16x128xi1>, vector<16x128xf32>
    %45 = vector.shape_cast %44 : vector<16x128xf32> to vector<2x8x128xf32>
    %cst_13 = arith.constant dense<0.000000e+00> : vector<8x128xf32>
    %46 = vector.multi_reduction <add>, %45, %cst_13 [0] : vector<2x8x128xf32> to vector<8x128xf32>
    %c0_14 = arith.constant 0 : index
    %c0_15 = arith.constant 0 : index
    %c0_16 = arith.constant 0 : index
    %47 = vector.load %arg4[%c0_14, %c0_15, %c0_16] : memref<1x8x128xf32, #tpu.memory_space<vmem>>, vector<1x8x128xf32>
    %48 = vector.shape_cast %46 : vector<8x128xf32> to vector<1x8x128xf32>
    %49 = arith.addf %47, %48 : vector<1x8x128xf32>
    %c0_17 = arith.constant 0 : index
    %c0_18 = arith.constant 0 : index
    %c0_19 = arith.constant 0 : index
    %50 = vector.load %arg4[%c0_17, %c0_18, %c0_19] : memref<1x8x128xf32, #tpu.memory_space<vmem>>, vector<1x8x128xf32>
    tpu.vector_store %arg4[%c0_17, %c0_18, %c0_19], %49 {strides = array<i32>} : memref<1x8x128xf32, #tpu.memory_space<vmem>>, vector<1x8x128xf32>,
    return
  }
  func.func @transform_0(%arg0: i32, %arg1: i32) -> (i32, i32) {
    %c1_i32 = arith.constant 1 : i32
    %0 = arith.muli %arg0, %c1_i32 : i32
    %1 = arith.addi %0, %arg1 : i32
    %c0_i32 = arith.constant 0 : i32
    %c0_i32_0 = arith.constant 0 : i32
    return %1, %c0_i32 : i32, i32
  }
  func.func @transform_1(%arg0: i32, %arg1: i32) -> (i32, i32) {
    %c1_i32 = arith.constant 1 : i32
    %0 = arith.muli %arg0, %c1_i32 : i32
    %1 = arith.addi %0, %arg1 : i32
    %c0_i32 = arith.constant 0 : i32
    %c0_i32_0 = arith.constant 0 : i32
    return %1, %c0_i32 : i32, i32
  }
  func.func @transform_2(%arg0: i32, %arg1: i32) -> (i32, i32, i32) {
    %c0_i32 = arith.constant 0 : i32
    %c0_i32_0 = arith.constant 0 : i32
    %c0_i32_1 = arith.constant 0 : i32
    return %arg0, %c0_i32, %c0_i32_0 : i32, i32, i32
  }
}

</mosaic_0001>

<llo_original>
// kernel: tpu_custom_call.1
$region0: #{tpu_custom_call.1}
  #allocation0 [shape = 'u32[]', space=smem, size = 0x4, offset = 0x4, fixed_abs, tag = 'smem constant byte address 0x4 - core index']
  #allocation1 [shape = 'u32[72,128]{1,0:T(1,128)}', space=vmem, size = 0x9000, scoped, tag = 'internal scratch']
  %s0 = inlined_call_operand.hbm [shape: f32[16,128], index: 0, kind: input, shape index: {}]
  %s1 = inlined_call_operand.hbm [shape: f32[16,128], index: 1, kind: input, shape index: {}]
  %s2 = inlined_call_operand.hbm [shape: f32[1,8,128], index: 2, kind: output, shape index: {}]
  %s3 = sld [smem:[#allocation0]]
  $region30: #{tpu_custom_call.1} parent=0
    _
  %s5 = ssub.s32 1, %s3
  %s6 = scalar_select 0, %s5, %s3
  $region1: #{tpu_custom_call.1} parent=0
    #allocation2 [shape = 'u8[8192]{0}', space=vmem, size = 0x2000, scoped, tag = 'input window, operand 0, single buffered']
    #allocation3 [shape = 's32[1]{0}', space=sflag, size = 0x4, scoped, tag = 'scoped memory for tpu_custom_call.1']
    #allocation4 [shape = 's32[1]{0}', space=sflag, size = 0x4, scoped, tag = 'scoped memory for tpu_custom_call.1']
    #allocation5 [shape = 'u8[8192]{0}', space=vmem, size = 0x2000, scoped, tag = 'input window, operand 1, single buffered']
    #allocation6 [shape = 's32[1]{0}', space=sflag, size = 0x4, scoped, tag = 'scoped memory for tpu_custom_call.1']
    #allocation7 [shape = 'u8[4096]{0}', space=vmem, size = 0x1000, scoped, tag = 'output window, operand 0, single buffered']
    %7 = vsyncpa [#allocation3], 0
    %8 = vsyncpa [#allocation6], 0
    %9 = vsyncpa [#allocation4], 0
    // Predicated region
    $region2: #{tpu_custom_call.1} parent=1 // pred_check
      _
    $region3: #{tpu_custom_call.1} parent=1 // pred_check_branch
      %11 = sbr.rel (0) target = $region5
    $region4: #{tpu_custom_call.1} parent=1 // pred_region
      %s12 = sadd.s32 0, 0
      %s13 = smul.u32 2, %s12
      %15 = vsyncadd [#allocation3], 0
      %s16 = smul.addr %s13, 8
      %s17 = scalar_lea.hbm %s0, %s16
      %s18 = sshll.u32 %s17, 4
      %s19 = int_to_ptr.hbm [resolvable:$true] %s18
      %s20 = sshll.u32 [#allocation2], 4
      %s21 = int_to_ptr.vmem [resolvable:$true] %s20
      %26 = dma.hbm_to_vmem [thread:$0]  %s19, 256, %s21, [#allocation3], 128, 128, 8
    $region5: #{tpu_custom_call.1} parent=1 // pred_fallthru
      _
    // Predicated region
    $region6: #{tpu_custom_call.1} parent=1 // pred_check
      _
    $region7: #{tpu_custom_call.1} parent=1 // pred_check_branch
      %28 = sbr.rel (0) target = $region9
    $region8: #{tpu_custom_call.1} parent=1 // pred_region
      %s29 = sadd.s32 0, 0
      %s30 = smul.u32 2, %s29
      %32 = vsyncadd [#allocation6], 0
      %s33 = smul.addr %s30, 8
      %s34 = scalar_lea.hbm %s1, %s33
      %s35 = sshll.u32 %s34, 4
      %s36 = int_to_ptr.hbm [resolvable:$true] %s35
      %s37 = sshll.u32 [#allocation5], 4
      %s38 = int_to_ptr.vmem [resolvable:$true] %s37
      %43 = dma.hbm_to_vmem [thread:$0]  %s36, 256, %s38, [#allocation6], 128, 128, 8
    $region9: #{tpu_custom_call.1} parent=1 // pred_fallthru
      _
    // Predicated region
    $region10: #{tpu_custom_call.1} parent=1 // pred_check
      _
    $region11: #{tpu_custom_call.1} parent=1 // pred_check_branch
      %45 = sbr.rel (0) target = $region13
    $region12: #{tpu_custom_call.1} parent=1 // pred_region
      %47 = dma.done [#allocation3], 256
    $region13: #{tpu_custom_call.1} parent=1 // pred_fallthru
      _
    // Predicated region
    $region14: #{tpu_custom_call.1} parent=1 // pred_check
      _
    $region15: #{tpu_custom_call.1} parent=1 // pred_check_branch
      %49 = sbr.rel (0) target = $region17
    $region16: #{tpu_custom_call.1} parent=1 // pred_region
      %51 = dma.done [#allocation6], 256
    $region17: #{tpu_custom_call.1} parent=1 // pred_fallthru
      _
    %s52 = sadd.s32 0, 0
    %s53 = smul.u32 2, %s52
    %s54 = sadd.s32 0, 0
    %s55 = smul.u32 2, %s54
    %p56 = scmp.eq.s32.totalorder 0, 0
    // Predicated region
    $region18: #{tpu_custom_call.1} parent=1 // pred_check
      %p57 = pneg %p56
    $region19: #{tpu_custom_call.1} parent=1 // pred_check_branch
      %59 = sbr.rel (%p57) target = $region21
    $region20: #{tpu_custom_call.1} parent=1 // pred_region
      %60 = vst [vmem:[#allocation7] sm:$0xff] 0.0
    $region21: #{tpu_custom_call.1} parent=1 // pred_fallthru
      _
    %v61 = vld [vmem:[#allocation2] sm:$0xff]
    %v62 = vld [vmem:[#allocation2 + $0x8] sm:$0xff]
    %v63 = vld [vmem:[#allocation5] sm:$0xff]
    %v64 = vld [vmem:[#allocation5 + $0x8] sm:$0xff]
    %v65 = vand.u32 2147483647, %v61
    %v66 = vand.u32 2147483647, %v62
    %v67 = vsub.f32 0.0, %v65
    %v68 = vsub.f32 0.0, %v66
    %v69 = vmul.f32 %v67, 1.442695
    %v70 = vpow.pop %v69
    %v71 = vmul.f32 %v68, 1.442695
    %v72 = vpow.pop %v71
    %v73 = vmax.f32 %v61, 0.0
    %v74 = vmax.f32 %v62, 0.0
    %v75 = vmul.f32 %v61, %v63
    %v76 = vmul.f32 %v62, %v64
    %v77 = vsub.f32 %v73, %v75
    %v78 = vsub.f32 %v74, %v76
    %v79 = vadd.f32 %v70, 1.0
    %v80 = vlog2.pop %v79
    %v81 = vmul.f32 %v80, 0.6931472
    %v82 = vmul.f32 -0.5, %v70
    %v83 = vadd.f32 %v82, 1.0
    %v84 = vmul.f32 %v83, %v70
    %v85 = vand.u32 2147483647, %v70
    %vm86 = vcmp.lt.f32.partialorder %v85, 0.0004427343
    %v87 = vsel %vm86, %v84, %v81
    %v88 = vadd.f32 %v72, 1.0
    %v89 = vlog2.pop %v88
    %v90 = vmul.f32 %v89, 0.6931472
    %v91 = vmul.f32 -0.5, %v72
    %v92 = vadd.f32 %v91, 1.0
    %v93 = vmul.f32 %v92, %v72
    %v94 = vand.u32 2147483647, %v72
    %vm95 = vcmp.lt.f32.partialorder %v94, 0.0004427343
    %v96 = vsel %vm95, %v93, %v90
    %v97 = vadd.f32 %v77, %v87
    %v98 = vadd.f32 %v78, %v96
    %v99 = vadd.f32 %v70, 1.0
    %v100 = vadd.f32 %v72, 1.0
    %v101 = vrcp.pop %v99
    %v102 = vmul.f32 %v99, %v101
    %v103 = vsub.f32 1.0, %v102
    %v104 = vmul.f32 %v101, %v103
    %v105 = vadd.f32 %v101, %v104
    %vm106 = vweird.f32 %v99
    %vm107 = vweird.f32 %v101
    %vm108 = vmor %vm106, %vm107
    %v109 = vsel %vm108, %v101, %v105
    %v110 = vand.u32 2147483647, %v99
    %vm111 = vcmp.eq.f32.partialorder %v110, 8.507059e+37
    %v112 = vand.u32 %v99, 2147483648
    %v113 = vor.u32 1.1754944e-38, %v112
    %v114 = vsel %vm111, %v113, %v109
    %v115 = vmul.f32 1.0, %v114
    %v116 = vrcp.pop %v100
    %v117 = vmul.f32 %v100, %v116
    %v118 = vsub.f32 1.0, %v117
    %v119 = vmul.f32 %v116, %v118
    %v120 = vadd.f32 %v116, %v119
    %vm121 = vweird.f32 %v100
    %vm122 = vweird.f32 %v116
    %vm123 = vmor %vm121, %vm122
    %v124 = vsel %vm123, %v116, %v120
    %v125 = vand.u32 2147483647, %v100
    %vm126 = vcmp.eq.f32.partialorder %v125, 8.507059e+37
    %v127 = vand.u32 %v100, 2147483648
    %v128 = vor.u32 1.1754944e-38, %v127
    %v129 = vsel %vm126, %v128, %v124
    %v130 = vmul.f32 1.0, %v129
    %vm131 = vcmp.ge.f32.partialorder %v61, 0.0
    %vm132 = vcmp.ge.f32.partialorder %v62, 0.0
    %v133 = vmul.f32 %v70, %v115
    %v134 = vmul.f32 %v72, %v130
    %v135 = vsel %vm131, %v115, %v133
    %v136 = vsel %vm132, %v130, %v134
    %v137 = vsub.f32 1.0, %v135
    %v138 = vsub.f32 1.0, %v136
    %v139 = vmul.f32 %v137, %v137
    %v140 = vmul.f32 %v138, %v138
    %v141 = vmul.f32 %v139, 0.25
    %v142 = vmul.f32 %v140, 0.25
    %v143 = vmul.f32 %v63, %v141
    %v144 = vmul.f32 %v64, %v142
    %v145 = vsub.f32 1.0, %v63
    %v146 = vsub.f32 1.0, %v64
    %v147 = vmul.f32 %v135, %v135
    %v148 = vmul.f32 %v136, %v136
    %v149 = vmul.f32 %v145, %v147
    %v150 = vmul.f32 %v146, %v148
    %v151 = vadd.f32 %v143, %v149
    %v152 = vadd.f32 %v144, %v150
    %v153 = vmul.f32 %v97, %v151
    %v154 = vmul.f32 %v98, %v152
    %s155 = sadd.s32 0, 0
    %s156 = smul.u32 %s155, 16
    %v157 = vlaneseq
    %v158 = vshrl.u32 %v157, 7
    %v159 = vadd.s32 %v158, 8
    %v160 = vstv %s156
    %v161 = vadd.s32 %v160, %v158
    %v162 = vadd.s32 %v160, %v159
    %vm163 = vcmp.lt.s32.totalorder %v161, 16
    %vm164 = vcmp.lt.s32.totalorder %v162, 16
    %v165 = vsel %vm163, %v153, 0.0
    %v166 = vsel %vm164, %v154, 0.0
    %v167 = vadd.f32 %v165, %v166
    %v168 = vld [vmem:[#allocation7] sm:$0xff]
    %v169 = vadd.f32 %v168, %v167
    %170 = vst [vmem:[#allocation7] sm:$0xff] %v169
    // Predicated region
    $region22: #{tpu_custom_call.1} parent=1 // pred_check
      _
    $region23: #{tpu_custom_call.1} parent=1 // pred_check_branch
      %172 = sbr.rel (0) target = $region25
    $region24: #{tpu_custom_call.1} parent=1 // pred_region
      %174 = vsyncadd [#allocation4], 0
      %s176 = sshll.u32 [#allocation7], 4
      %s177 = int_to_ptr.vmem [resolvable:$true] %s176
      %s178 = sshll.u32 %s2, 4
      %s179 = int_to_ptr.hbm [resolvable:$true] %s178
      %181 = dma.vmem_to_hbm [thread:$0]  %s177, 128, %s179, [#allocation4]
    $region25: #{tpu_custom_call.1} parent=1 // pred_fallthru
      _
    // Predicated region
    $region26: #{tpu_custom_call.1} parent=1 // pred_check
      _
    $region27: #{tpu_custom_call.1} parent=1 // pred_check_branch
      %183 = sbr.rel (0) target = $region29
    $region28: #{tpu_custom_call.1} parent=1 // pred_region
      %185 = dma.done [#allocation4], 128
    $region29: #{tpu_custom_call.1} parent=1 // pred_fallthru
      _
    %186 = vsyncpa [#allocation3], 1
    %187 = vsyncpa [#allocation6], 1
    %188 = vsyncpa [#allocation4], 1

</llo_original>
